<compile_context>
chip_gen: v7x
topology: tpu7x:2x2x1
jax: 0.10.0
libtpu: 0.0.40
codegen_flags: <defaults>
</compile_context>

<pallas_src>
import jax
import jax.numpy as jnp
from jax import lax
from jax.experimental import pallas as pl
from jax.experimental.pallas import tpu as pltpu


def _pooler_kernel(x_ref, w_ref, b_ref, o_ref):
    # x_ref: (B, H)    first-token activations (resident across all stripes)
    # w_ref: (TN, H)   weight stripe, PyTorch (out, in) layout
    # b_ref: (1, TN)   bias stripe
    # o_ref: (B, TN)   output stripe
    x = x_ref[...]
    w = w_ref[...]
    # Cast activations (tiny, already in VMEM) to the stored weight dtype so
    # the MXU sees matching operands; never touch the weight dtype outside
    # the kernel (that would add an extra HBM pass over the weight).
    y = lax.dot_general(
        x.astype(w.dtype), w,
        dimension_numbers=(((1,), (1,)), ((), ())),   # contract x.H with w.H_in
        preferred_element_type=jnp.float32,
    )
    y = y + b_ref[...].astype(jnp.float32)
    o_ref[...] = jnp.tanh(y).astype(o_ref.dtype)


def _default_num_stripes(h_out):
    """1 stripe on single-TC chips (v5e/v6e); 2 even stripes on v7x (2 cores)."""
    try:
        kind = jax.devices()[0].device_kind.lower()
    except Exception:
        kind = ""
    two_cores = "v7" in kind
    if two_cores and h_out % 256 == 0:   # two stripes, each a multiple of 128 lanes
        return 2
    return 1


def electra_pooler(hidden_states, weight, bias, *, num_stripes=None):
    """ElectraPooler forward.

    hidden_states: (B, S, H)
    weight:        (H_out, H_in) in PyTorch nn.Linear layout (H_out == H_in == H),
                   streamed in whatever dtype it is stored in (bf16 recommended).
    bias:          (H,)
    """
    B, S, H = hidden_states.shape
    h_out, h_in = weight.shape
    assert h_in == H and h_out == H and bias.shape == (H,)

    if num_stripes is None:
        num_stripes = _default_num_stripes(h_out)
    assert h_out % num_stripes == 0
    tn = h_out // num_stripes
    assert num_stripes == 1 or tn % 128 == 0, "multi-stripe widths must be lane-dense"

    # Wrapper-side first-token slice: a few KB, one contiguous (B, H) DMA into
    # the kernel instead of a strided squeezed-seq-dim window.
    first_token = hidden_states[:, 0, :]

    b2d = bias.reshape(1, h_out)

    cost = pl.CostEstimate(
        flops=2 * B * H * H,
        transcendentals=B * H,
        bytes_accessed=(
            H * H * weight.dtype.itemsize          # the stream that matters
            + B * H * first_token.dtype.itemsize   # activations in
            + H * bias.dtype.itemsize              # bias in
            + B * H * hidden_states.dtype.itemsize # pooled out
        ),
    )

    return pl.pallas_call(
        _pooler_kernel,
        out_shape=jax.ShapeDtypeStruct((B, h_out), hidden_states.dtype),
        grid=(num_stripes,),
        in_specs=[
            # Same block index for every stripe -> stays resident in VMEM.
            pl.BlockSpec((B, H), lambda j: (0, 0)),
            # Weight streamed as (TN, H) output stripes.
            pl.BlockSpec((tn, H), lambda j: (j, 0)),
            # Matching bias stripe.
            pl.BlockSpec((1, tn), lambda j: (0, j)),
        ],
        out_specs=pl.BlockSpec((B, tn), lambda j: (0, j)),
        compiler_params=pltpu.CompilerParams(
            # Independent output stripes: shard across TensorCores on v7x.
            dimension_semantics=("parallel",),
        ),
        cost_estimate=cost,
    )(first_token, weight, b2d)


def _ref_pooler(hidden_states, weight, bias):
    first_token = hidden_states[:, 0, :]
    return jnp.tanh(first_token @ weight.astype(jnp.float32).T + bias)


if __name__ == "__main__":
    key = jax.random.PRNGKey(0)

    # --- Test 1: small module-consistent shapes, f32 weights, default stripes.
    B, S, H = 2, 8, 32
    k_x, k_w, k_b, k_x2, k_w2, k_b2 = jax.random.split(key, 6)

    hidden_states = jax.random.normal(k_x, (B, S, H), dtype=jnp.float32)
    weight = jax.random.normal(k_w, (H, H), dtype=jnp.float32) * 0.02
    bias = jax.random.normal(k_b, (H,), dtype=jnp.float32) * 0.02

    ref = _ref_pooler(hidden_states, weight, bias)
    out = jax.block_until_ready(electra_pooler(hidden_states, weight, bias))
    assert out.shape == (B, H)
    assert jnp.allclose(out, ref, atol=1e-5, rtol=1e-5), "f32 path mismatch vs reference"

    # --- Test 2: exercise the multi-stripe index maps + bf16-stored weights.
    H2 = 256
    hs2 = jax.random.normal(k_x2, (B, S, H2), dtype=jnp.float32)
    w2_f32 = jax.random.normal(k_w2, (H2, H2), dtype=jnp.float32) * 0.02
    b2 = jax.random.normal(k_b2, (H2,), dtype=jnp.float32) * 0.02
    w2_bf16 = w2_f32.astype(jnp.bfloat16)  # weight stored as bf16 (one-time, at load)

    ref2 = _ref_pooler(hs2, w2_bf16, b2)
    out2 = jax.block_until_ready(
        electra_pooler(hs2, w2_bf16, b2, num_stripes=2)  # 2 even lane-dense stripes
    )
    assert out2.shape == (B, H2)
    assert jnp.allclose(out2, ref2, atol=1e-2, rtol=1e-2), "bf16 multi-stripe mismatch"

    print("KERNEL_OK")
</pallas_src>

<mosaic_0001>
module attributes {stable_mosaic.version = 11 : i64} {
  func.func @_pooler_kernel(%arg0: i32, %arg1: memref<2x32xf32, #tpu.memory_space<vmem>>, %arg2: memref<32x32xf32, #tpu.memory_space<vmem>>, %arg3: memref<1x32xf32, #tpu.memory_space<vmem>>, %arg4: memref<2x32xf32, #tpu.memory_space<vmem>>) attributes {dimension_semantics = [#tpu.dimension_semantics<parallel>], iteration_bounds = array<i64: 1>, scalar_prefetch = 0 : i64, scratch_operands = 0 : i64, tpu.core_type = #tpu.core_type<tc>, window_params = [{pipeline_mode = #tpu.pipeline_mode<synchronous>, transform_indices = @transform_0, window_bounds = array<i64: 2, 32>}, {transform_indices = @transform_1, window_bounds = array<i64: 32, 32>}, {transform_indices = @transform_2, window_bounds = array<i64: 1, 32>}, {transform_indices = @transform_3, window_bounds = array<i64: 2, 32>}]} {
    %c0 = arith.constant 0 : index
    %c0_0 = arith.constant 0 : index
    %0 = vector.load %arg1[%c0, %c0_0] : memref<2x32xf32, #tpu.memory_space<vmem>>, vector<2x32xf32>
    %c0_1 = arith.constant 0 : index
    %c0_2 = arith.constant 0 : index
    %1 = vector.load %arg2[%c0_1, %c0_2] : memref<32x32xf32, #tpu.memory_space<vmem>>, vector<32x32xf32>
    %cst = arith.constant dense<0.000000e+00> : vector<2x32xf32>
    %2 = tpu.matmul %0, %1, %cst {dimension_numbers = #tpu.dot_dimension_numbers<[1], [1], [0], [0], [0, 0, 1, 0], [], []>} : vector<2x32xf32>, vector<32x32xf32>, vector<2x32xf32> -> vector<2x32xf32>
    %c0_3 = arith.constant 0 : index
    %c0_4 = arith.constant 0 : index
    %3 = vector.load %arg3[%c0_3, %c0_4] : memref<1x32xf32, #tpu.memory_space<vmem>>, vector<1x32xf32>
    %4 = vector.broadcast %3 : vector<1x32xf32> to vector<2x32xf32>
    %5 = arith.addf %2, %4 : vector<2x32xf32>
    %6 = math.tanh %5 : vector<2x32xf32>
    %c0_5 = arith.constant 0 : index
    %c0_6 = arith.constant 0 : index
    %7 = vector.load %arg4[%c0_5, %c0_6] : memref<2x32xf32, #tpu.memory_space<vmem>>, vector<2x32xf32>
    tpu.vector_store %arg4[%c0_5, %c0_6], %6 {strides = array<i32>} : memref<2x32xf32, #tpu.memory_space<vmem>>, vector<2x32xf32>,
    return
  }
  func.func @transform_0(%arg0: i32) -> (i32, i32) {
    %c0_i32 = arith.constant 0 : i32
    %c0_i32_0 = arith.constant 0 : i32
    %c0_i32_1 = arith.constant 0 : i32
    return %c0_i32, %c0_i32_0 : i32, i32
  }
  func.func @transform_1(%arg0: i32) -> (i32, i32) {
    %c0_i32 = arith.constant 0 : i32
    %c0_i32_0 = arith.constant 0 : i32
    return %arg0, %c0_i32 : i32, i32
  }
  func.func @transform_2(%arg0: i32) -> (i32, i32) {
    %c0_i32 = arith.constant 0 : i32
    %c0_i32_0 = arith.constant 0 : i32
    return %c0_i32, %arg0 : i32, i32
  }
  func.func @transform_3(%arg0: i32) -> (i32, i32) {
    %c0_i32 = arith.constant 0 : i32
    %c0_i32_0 = arith.constant 0 : i32
    return %c0_i32, %arg0 : i32, i32
  }
}

</mosaic_0001>

<llo_original>
// kernel: tpu_custom_call.1
$region0: #{tpu_custom_call.1}
  #allocation0 [shape = 'u32[]', space=smem, size = 0x4, offset = 0x4, fixed_abs, tag = 'smem constant byte address 0x4 - core index']
  #allocation1 [shape = 'u32[144,128]{1,0:T(1,128)}', space=vmem, size = 0x12000, scoped, tag = 'internal scratch']
  %s0 = inlined_call_operand.hbm [shape: f32[2,32], index: 0, kind: input, shape index: {}]
  %s1 = inlined_call_operand.hbm [shape: f32[32,32], index: 1, kind: input, shape index: {}]
  %s2 = inlined_call_operand.vmem [shape: f32[1,32], index: 2, kind: input, shape index: {}]
  %s3 = inlined_call_operand.hbm [shape: f32[2,32], index: 3, kind: output, shape index: {}]
  %s4 = sld [smem:[#allocation0]]
  $region30: #{tpu_custom_call.1} parent=0
    _
  %s6 = ssub.s32 1, %s4
  %s7 = scalar_select 0, %s6, %s4
  $region1: #{tpu_custom_call.1} parent=0
    #allocation2 [shape = 'u8[1024]{0}', space=vmem, size = 0x400, scoped, tag = 'input window, operand 0, single buffered']
    #allocation3 [shape = 's32[1]{0}', space=sflag, size = 0x4, scoped, tag = 'scoped memory for tpu_custom_call.1']
    #allocation4 [shape = 's32[1]{0}', space=sflag, size = 0x4, scoped, tag = 'scoped memory for tpu_custom_call.1']
    #allocation5 [shape = 'u8[16384]{0}', space=vmem, size = 0x4000, scoped, tag = 'input window, operand 1, single buffered']
    #allocation6 [shape = 's32[1]{0}', space=sflag, size = 0x4, scoped, tag = 'scoped memory for tpu_custom_call.1']
    #allocation7 [shape = 'u8[1024]{0}', space=vmem, size = 0x400, scoped, tag = 'output window, operand 0, single buffered']
    %8 = vsyncpa [#allocation3], 0
    %9 = vsyncpa [#allocation6], 0
    %10 = vsyncpa [#allocation4], 0
    // Predicated region
    $region2: #{tpu_custom_call.1} parent=1 // pred_check
      _
    $region3: #{tpu_custom_call.1} parent=1 // pred_check_branch
      %12 = sbr.rel (0) target = $region5
    $region4: #{tpu_custom_call.1} parent=1 // pred_region
      %s14 = ssub.s32 32, 32
      %15 = vsyncadd [#allocation3], %s14
      %s17 = sshll.u32 [#allocation2], 4
      %s18 = int_to_ptr.vmem [resolvable:$true] %s17
      %20 = dma.hbm_to_vmem [thread:$0]  %s0, 32, %s18, [#allocation3]
    $region5: #{tpu_custom_call.1} parent=1 // pred_fallthru
      _
    // Predicated region
    $region6: #{tpu_custom_call.1} parent=1 // pred_check
      _
    $region7: #{tpu_custom_call.1} parent=1 // pred_check_branch
      %22 = sbr.rel (0) target = $region9
    $region8: #{tpu_custom_call.1} parent=1 // pred_region
      %s24 = ssub.s32 512, 512
      %25 = vsyncadd [#allocation6], %s24
      %s26 = sshll.u32 [#allocation5], 4
      %s27 = int_to_ptr.vmem [resolvable:$true] %s26
      %32 = dma.hbm_to_vmem [thread:$0]  %s1, 512, %s27, [#allocation6], 128, 128, 8
    $region9: #{tpu_custom_call.1} parent=1 // pred_fallthru
      _
    // Predicated region
    $region10: #{tpu_custom_call.1} parent=1 // pred_check
      _
    $region11: #{tpu_custom_call.1} parent=1 // pred_check_branch
      %34 = sbr.rel (0) target = $region13
    $region12: #{tpu_custom_call.1} parent=1 // pred_region
      _
    $region13: #{tpu_custom_call.1} parent=1 // pred_fallthru
      _
    // Predicated region
    $region14: #{tpu_custom_call.1} parent=1 // pred_check
      _
    $region15: #{tpu_custom_call.1} parent=1 // pred_check_branch
      %36 = sbr.rel (0) target = $region17
    $region16: #{tpu_custom_call.1} parent=1 // pred_region
      %37 = dma.done [#allocation3], 32
    $region17: #{tpu_custom_call.1} parent=1 // pred_fallthru
      _
    // Predicated region
    $region18: #{tpu_custom_call.1} parent=1 // pred_check
      _
    $region19: #{tpu_custom_call.1} parent=1 // pred_check_branch
      %39 = sbr.rel (0) target = $region21
    $region20: #{tpu_custom_call.1} parent=1 // pred_region
      %40 = dma.done [#allocation6], 512
    $region21: #{tpu_custom_call.1} parent=1 // pred_fallthru
      _
    %v41 = vld [vmem:[#allocation2] sm:$0x3]
    %v42 = vld [vmem:[#allocation5] sm:$0xff]
    %v43 = vld [vmem:[#allocation5 + $0x8] sm:$0xff]
    %v44 = vld [vmem:[#allocation5 + $0x10] sm:$0xff]
    %v45 = vld [vmem:[#allocation5 + $0x18] sm:$0xff]
    %v46 = vld [vmem:[%s2] sm:$0x1]
    %v48 = vlaneseq
    %v49 = vshrl.u32 %v48, 7
    %v50 = vsub.s32 0, %v49
    %v51 = vrot.slane %v46, %v50
    %vm53 = vcmask 261120
    %v55 = vsel %vm53, %v41, 0
    %v58 = vsel %vm53, %v42, 0
    %v61 = vsel %vm53, %v43, 0
    %v64 = vsel %vm53, %v44, 0
    %v67 = vsel %vm53, %v45, 0
    %69 = vmatprep.subr.mxu0 0.0
    %70 = vmatpush1.xpose.msra.mxu0 %v58
    %71 = vmatprep.subr.mxu0 0.0
    %72 = vmatpush1.xpose.msra.mxu0 %v61
    %73 = vmatprep.subr.mxu0 0.0
    %74 = vmatpush1.xpose.msra.mxu0 %v64
    %75 = vmatprep.subr.mxu0 0.0
    %76 = vmatpush1.xpose.msra.mxu0 %v67
    %77 = vmatprep.subr.mxu0 0.0
    %78 = vmatpush1.xpose.msra.mxu0 0.0
    %79 = vmatprep.subr.mxu0 0.0
    %80 = vmatpush1.xpose.msra.mxu0 0.0
    %81 = vmatprep.subr.mxu0 0.0
    %82 = vmatpush1.xpose.msra.mxu0 0.0
    %83 = vmatprep.subr.mxu0 0.0
    %84 = vmatpush1.xpose.msra.mxu0 0.0
    %85 = vmatprep.subr.mxu0 0.0
    %86 = vmatpush1.xpose.msra.mxu0 0.0
    %87 = vmatprep.subr.mxu0 0.0
    %88 = vmatpush1.xpose.msra.mxu0 0.0
    %89 = vmatprep.subr.mxu0 0.0
    %90 = vmatpush1.xpose.msra.mxu0 0.0
    %91 = vmatprep.subr.mxu0 0.0
    %92 = vmatpush1.xpose.msra.mxu0 0.0
    %93 = vmatprep.subr.mxu0 0.0
    %94 = vmatpush1.xpose.msra.mxu0 0.0
    %95 = vmatprep.subr.mxu0 0.0
    %96 = vmatpush1.xpose.msra.mxu0 0.0
    %97 = vmatprep.subr.mxu0 0.0
    %98 = vmatpush1.xpose.msra.mxu0 0.0
    %99 = vmatprep.subr.mxu0 0.0
    %100 = vmatpush1.xpose.msra.mxu0 0.0
    %101 = vmatprep.subr.mxu0 0.0
    %102 = vmatpush1.xpose.msra.mxu0 0.0
    %103 = vmatprep.subr.mxu0 0.0
    %104 = vmatpush1.xpose.msra.mxu0 0.0
    %105 = vmatprep.subr.mxu0 0.0
    %106 = vmatpush1.xpose.msra.mxu0 0.0
    %107 = vmatprep.subr.mxu0 0.0
    %108 = vmatpush1.xpose.msra.mxu0 0.0
    %109 = vmatprep.subr.mxu0 0.0
    %110 = vmatpush1.xpose.msra.mxu0 0.0
    %111 = vmatprep.subr.mxu0 0.0
    %112 = vmatpush1.xpose.msra.mxu0 0.0
    %113 = vmatprep.subr.mxu0 0.0
    %114 = vmatpush1.xpose.msra.mxu0 0.0
    %115 = vmatprep.subr.mxu0 0.0
    %116 = vmatpush1.xpose.msra.mxu0 0.0
    %117 = vmatprep.subr.mxu0 0.0
    %118 = vmatpush1.xpose.msra.mxu0 0.0
    %119 = vmatprep.subr.mxu0 0.0
    %120 = vmatpush1.xpose.msra.mxu0 0.0
    %121 = vmatprep.subr.mxu0 0.0
    %122 = vmatpush1.xpose.msra.mxu0 0.0
    %123 = vmatprep.subr.mxu0 0.0
    %124 = vmatpush1.xpose.msra.mxu0 0.0
    %125 = vmatprep.subr.mxu0 0.0
    %126 = vmatpush1.xpose.msra.mxu0 0.0
    %127 = vmatprep.subr.mxu0 0.0
    %128 = vmatpush1.xpose.msra.mxu0 0.0
    %129 = vmatprep.subr.mxu0 0.0
    %130 = vmatpush1.xpose.msra.mxu0 0.0
    %131 = vmatprep.subr.mxu0 0.0
    %132 = vmatpush1.xpose.msra.mxu0 0.0
    %133 = vmatprep.mubr.f32.mxu0 0.0
    %134 = vmatmul.mubr.f32.gmra.mrb[0].mxu0 %v55
    %v135 = vpop.f32.mrb[0].mxu0
    %v136 = vadd.f32 %v51, %v135
    %v137 = vpop.f32.mrb[0].mxu0
    %138 = vdwg.mxu0
    %v139 = vtanh.pop %v136
    %vm140 = vcmask 254976
    %141 = vst.msk [vmem:[#allocation7] sm:$0x3] %vm140, %v139
    // Predicated region
    $region22: #{tpu_custom_call.1} parent=1 // pred_check
      _
    $region23: #{tpu_custom_call.1} parent=1 // pred_check_branch
      %143 = sbr.rel (0) target = $region25
    $region24: #{tpu_custom_call.1} parent=1 // pred_region
      %s145 = ssub.s32 32, 32
      %146 = vsyncadd [#allocation4], %s145
      %s148 = sshll.u32 [#allocation7], 4
      %s149 = int_to_ptr.vmem [resolvable:$true] %s148
      %151 = dma.vmem_to_hbm [thread:$0]  %s149, 32, %s3, [#allocation4]
    $region25: #{tpu_custom_call.1} parent=1 // pred_fallthru
      _
    // Predicated region
    $region26: #{tpu_custom_call.1} parent=1 // pred_check
      _
    $region27: #{tpu_custom_call.1} parent=1 // pred_check_branch
      %153 = sbr.rel (0) target = $region29
    $region28: #{tpu_custom_call.1} parent=1 // pred_region
      %154 = dma.done [#allocation4], 32
    $region29: #{tpu_custom_call.1} parent=1 // pred_fallthru
      _
    %155 = vsyncpa [#allocation3], 1
    %156 = vsyncpa [#allocation6], 1
    %157 = vsyncpa [#allocation4], 1

</llo_original>
